<compile_context>
chip_gen: v7x
topology: tpu7x:2x2x1
jax: 0.10.0
libtpu: 0.0.40
codegen_flags: <defaults>
</compile_context>

<pallas_src>
import jax
import jax.numpy as jnp
from jax import lax
from jax.experimental import pallas as pl
from jax.experimental.pallas import tpu as pltpu


def _round_up(x, m):
    return ((x + m - 1) // m) * m


def _adda_predictor_kernel(x_ref, w_ref, b_ref, o_ref):
    # x: [TILE_N, E] f32 (streamed), w: [E, Cp] f32, b: [1, Cp] f32 (resident).
    logits = jnp.dot(x_ref[...], w_ref[...],
                     preferred_element_type=jnp.float32) + b_ref[...]
    # Numerically stable log_softmax along the class (lane) axis, all f32.
    # exp/log run on the EUP slot and are hidden under the HBM-bound x stream.
    m = jnp.max(logits, axis=-1, keepdims=True)
    s = logits - m
    lse = jnp.log(jnp.sum(jnp.exp(s), axis=-1, keepdims=True))
    o_ref[...] = s - lse


def _choose_tile_n(n, emb_dim, ncls_pad, vmem_budget_bytes=12 << 20):
    """Batch-tile rows: amortize per-step overhead, fit VMEM, feed 2 TCs."""
    if n <= 16:
        return n  # single full-extent block is always legal
    # Roofline target: ~4 MiB of f32 x per tile (512+ element tiles reach
    # ~85% of the HBM roofline), rounded to a multiple of 256 rows.
    tile = max(256, ((4 << 20) // (4 * emb_dim)) // 256 * 256)
    # VMEM cap: 2x double-buffered (x tile + out tile) + resident W/b (x2 for
    # conservatism) must fit the budget (v5e's default scoped VMEM is 16 MiB).
    resident = 2 * (emb_dim * ncls_pad + ncls_pad) * 4
    per_row = 2 * 4 * (emb_dim + ncls_pad)
    tile_vmem = max(8, (vmem_budget_bytes - resident) // per_row // 8 * 8)
    tile = min(tile, tile_vmem)
    # Guarantee >= 2 grid steps so v7x's second TensorCore gets work.
    half = _round_up((n + 1) // 2, 8)
    tile = min(tile, half)
    return max(8, tile // 8 * 8)


@jax.jit
def adda_predictor_forward(x, w, b):
    """log_softmax(x @ w + b, axis=1).

    x: [N, emb_dim] f32, w: [emb_dim, ncls] f32 (stored [in, out]),
    b: [ncls] or [1, ncls] f32.  Returns log-probabilities [N, ncls] f32.
    """
    n, emb_dim = x.shape
    ncls = w.shape[1]
    b = jnp.reshape(b, (1, ncls))

    # Lane-pad the class dim to a multiple of 128: zero weight columns and a
    # large *finite* negative bias so padded logits underflow cleanly in exp.
    ncls_pad = _round_up(ncls, 128)
    if ncls_pad != ncls:
        w = jnp.pad(w, ((0, 0), (0, ncls_pad - ncls)))
        b = jnp.pad(b, ((0, 0), (0, ncls_pad - ncls)), constant_values=-1e30)

    tile_n = _choose_tile_n(n, emb_dim, ncls_pad)
    grid = (pl.cdiv(n, tile_n),)

    out = pl.pallas_call(
        _adda_predictor_kernel,
        out_shape=jax.ShapeDtypeStruct((n, ncls_pad), jnp.float32),
        grid_spec=pltpu.PrefetchScalarGridSpec(
            num_scalar_prefetch=0,
            grid=grid,
            in_specs=[
                pl.BlockSpec((tile_n, emb_dim), lambda i: (i, 0)),    # streamed x
                pl.BlockSpec((emb_dim, ncls_pad), lambda i: (0, 0)),  # resident W
                pl.BlockSpec((1, ncls_pad), lambda i: (0, 0)),        # resident b
            ],
            out_specs=pl.BlockSpec((tile_n, ncls_pad), lambda i: (i, 0)),
        ),
        compiler_params=pltpu.CompilerParams(
            dimension_semantics=("parallel",),        # megacore split on v7x
            vmem_limit_bytes=32 * 1024 * 1024,        # headroom over tile budget
        ),
        cost_estimate=pl.CostEstimate(
            flops=2 * n * emb_dim * ncls_pad,
            transcendentals=n * (ncls_pad + 1),       # exp per logit + log per row
            bytes_accessed=4 * (n * emb_dim + emb_dim * ncls_pad
                                + ncls_pad + n * ncls_pad),
        ),
    )(x, w, b)

    if ncls_pad != ncls:
        out = out[:, :ncls]   # drop padded classes (tiny copy)
    return out


def init_params(key, emb_dim, ncls_source):
    """PyTorch-style Linear init; weight stored as [in, out]."""
    kw, kb = jax.random.split(key)
    bound = 1.0 / jnp.sqrt(emb_dim)
    w = jax.random.uniform(kw, (emb_dim, ncls_source), jnp.float32, -bound, bound)
    b = jax.random.uniform(kb, (1, ncls_source), jnp.float32, -bound, bound)
    return w, b


if __name__ == "__main__":
    key = jax.random.PRNGKey(0)
    k_x, k_p = jax.random.split(key)

    batch, emb_dim, ncls_source = 64, 64, 10
    x = jax.random.normal(k_x, (batch, emb_dim), jnp.float32)
    w, b = init_params(k_p, emb_dim, ncls_source)

    out = jax.block_until_ready(adda_predictor_forward(x, w, b))

    # True f32 reference (HIGHEST precision matmul), matching PyTorch semantics.
    ref = jax.nn.log_softmax(
        jnp.dot(x, w, precision=lax.Precision.HIGHEST) + b, axis=1)

    assert out.shape == (batch, ncls_source)
    assert jnp.allclose(out, ref, atol=2e-3, rtol=2e-3), "mismatch vs f32 reference"
    # Rows of log_softmax must exponentiate-sum to 1.
    assert jnp.allclose(jnp.sum(jnp.exp(out), axis=1), 1.0, atol=1e-4)

    print("KERNEL_OK")
</pallas_src>

<mosaic_0001>
module attributes {stable_mosaic.version = 11 : i64} {
  func.func @_adda_predictor_kernel(%arg0: i32, %arg1: memref<32x64xf32, #tpu.memory_space<vmem>>, %arg2: memref<64x128xf32, #tpu.memory_space<vmem>>, %arg3: memref<1x128xf32, #tpu.memory_space<vmem>>, %arg4: memref<32x128xf32, #tpu.memory_space<vmem>>) attributes {dimension_semantics = [#tpu.dimension_semantics<parallel>], iteration_bounds = array<i64: 2>, scalar_prefetch = 0 : i64, scratch_operands = 0 : i64, tpu.core_type = #tpu.core_type<tc>, window_params = [{transform_indices = @transform_0, window_bounds = array<i64: 32, 64>}, {pipeline_mode = #tpu.pipeline_mode<synchronous>, transform_indices = @transform_1, window_bounds = array<i64: 64, 128>}, {pipeline_mode = #tpu.pipeline_mode<synchronous>, transform_indices = @transform_2, window_bounds = array<i64: 1, 128>}, {transform_indices = @transform_3, window_bounds = array<i64: 32, 128>}]} {
    %c0 = arith.constant 0 : index
    %c0_0 = arith.constant 0 : index
    %0 = vector.load %arg1[%c0, %c0_0] : memref<32x64xf32, #tpu.memory_space<vmem>>, vector<32x64xf32>
    %c0_1 = arith.constant 0 : index
    %c0_2 = arith.constant 0 : index
    %1 = vector.load %arg2[%c0_1, %c0_2] : memref<64x128xf32, #tpu.memory_space<vmem>>, vector<64x128xf32>
    %cst = arith.constant dense<0.000000e+00> : vector<32x128xf32>
    %2 = tpu.matmul %0, %1, %cst {dimension_numbers = #tpu.dot_dimension_numbers<[1], [0], [0], [1], [0, 0, 1, 1], [], []>} : vector<32x64xf32>, vector<64x128xf32>, vector<32x128xf32> -> vector<32x128xf32>
    %c0_3 = arith.constant 0 : index
    %c0_4 = arith.constant 0 : index
    %3 = vector.load %arg3[%c0_3, %c0_4] : memref<1x128xf32, #tpu.memory_space<vmem>>, vector<1x128xf32>
    %4 = vector.broadcast %3 : vector<1x128xf32> to vector<32x128xf32>
    %5 = arith.addf %2, %4 : vector<32x128xf32>
    %cst_5 = arith.constant dense<0xFF800000> : vector<32xf32>
    %6 = vector.multi_reduction <maximumf>, %5, %cst_5 [1] : vector<32x128xf32> to vector<32xf32>
    %7 = vector.shape_cast %6 : vector<32xf32> to vector<32x1xf32>
    %8 = vector.broadcast %7 : vector<32x1xf32> to vector<32x128xf32>
    %9 = arith.subf %5, %8 : vector<32x128xf32>
    %10 = math.exp %9 : vector<32x128xf32>
    %cst_6 = arith.constant dense<0.000000e+00> : vector<32xf32>
    %11 = vector.multi_reduction <add>, %10, %cst_6 [1] : vector<32x128xf32> to vector<32xf32>
    %12 = vector.shape_cast %11 : vector<32xf32> to vector<32x1xf32>
    %13 = math.log %12 : vector<32x1xf32>
    %14 = vector.broadcast %13 : vector<32x1xf32> to vector<32x128xf32>
    %15 = arith.subf %9, %14 : vector<32x128xf32>
    %c0_7 = arith.constant 0 : index
    %c0_8 = arith.constant 0 : index
    %16 = vector.load %arg4[%c0_7, %c0_8] : memref<32x128xf32, #tpu.memory_space<vmem>>, vector<32x128xf32>
    tpu.vector_store %arg4[%c0_7, %c0_8], %15 {strides = array<i32>} : memref<32x128xf32, #tpu.memory_space<vmem>>, vector<32x128xf32>,
    return
  }
  func.func @transform_0(%arg0: i32) -> (i32, i32) {
    %c0_i32 = arith.constant 0 : i32
    %c0_i32_0 = arith.constant 0 : i32
    return %arg0, %c0_i32 : i32, i32
  }
  func.func @transform_1(%arg0: i32) -> (i32, i32) {
    %c0_i32 = arith.constant 0 : i32
    %c0_i32_0 = arith.constant 0 : i32
    %c0_i32_1 = arith.constant 0 : i32
    return %c0_i32, %c0_i32_0 : i32, i32
  }
  func.func @transform_2(%arg0: i32) -> (i32, i32) {
    %c0_i32 = arith.constant 0 : i32
    %c0_i32_0 = arith.constant 0 : i32
    %c0_i32_1 = arith.constant 0 : i32
    return %c0_i32, %c0_i32_0 : i32, i32
  }
  func.func @transform_3(%arg0: i32) -> (i32, i32) {
    %c0_i32 = arith.constant 0 : i32
    %c0_i32_0 = arith.constant 0 : i32
    return %arg0, %c0_i32 : i32, i32
  }
}

</mosaic_0001>

<llo_original>
// kernel: adda_predictor_forward.1
$region0: #{adda_predictor_forward.1}
  #allocation0 [shape = 'u32[]', space=smem, size = 0x4, offset = 0x4, fixed_abs, tag = 'smem constant byte address 0x4 - core index']
  #allocation1 [shape = 'u32[144,128]{1,0:T(1,128)}', space=vmem, size = 0x12000, scoped, tag = 'internal scratch']
  %s0 = inlined_call_operand.vmem [shape: f32[64,64], index: 0, kind: input, shape index: {}]
  %s1 = inlined_call_operand.vmem [shape: f32[64,128], index: 1, kind: input, shape index: {}]
  %s2 = inlined_call_operand.vmem [shape: f32[1,128], index: 2, kind: input, shape index: {}]
  %s3 = inlined_call_operand.vmem [shape: f32[64,128], index: 3, kind: output, shape index: {}]
  %s4 = sld [smem:[#allocation0]]
  $region45: #{adda_predictor_forward.1} parent=0
    _
  %s6 = ssub.s32 1, %s4
  %s7 = scalar_select 0, %s6, %s4
  loop: start=0, step=1, limit=4
  $region2: #{adda_predictor_forward.1} parent=0 // loop_pre_header
    _
  $region3: #{adda_predictor_forward.1} parent=0 // loop_header
    %s9 = sphi 0, %s13
    %p10 = scmp.ge.s32.totalorder %s9, 4
    %s19 = sphi 0, %s21
    %s22 = sphi 0, %s19
    %s23 = sphi 0, %s22
    %s39 = sphi 0, %s23
    %s43 = sphi 0, %s43
    %s45 = sphi 0, %s43
    %s46 = sphi 0, %s45
    %s60 = sphi 0, %s46
    %s64 = sphi 0, %s64
    %s66 = sphi 0, %s64
    %s67 = sphi 0, %s66
    %s81 = sphi 0, %s67
    %s87 = sphi 0, %s89
    %s90 = sphi 0, %s87
    %s91 = sphi 0, %s90
    %s107 = sphi 0, %s91
  $region4: #{adda_predictor_forward.1} parent=0 // loop_header_branch
    %12 = sbr.rel (%p10) target = $region8
  $region5: #{adda_predictor_forward.1} parent=0 // loop_body
    %s14 = ssub.s32 %s9, 1
    %s15 = ssub.s32 %s9, 2
    %s16 = sadd.s32 %s9, 1
    %s17 = ssub.s32 %s9, %s16
    %p18 = scmp.eq.s32.totalorder %s17, 0
    %s20 = sadd.s32 %s19, 1
    %s21 = scalar_select %p18, %s19, %s20
    %p24 = pneg %p18
    %p25 = scmp.eq.s32.totalorder %s9, 1
    %p26 = por %p24, %p25
    %p27 = scmp.ne.s32.totalorder %s19, %s22
    %p28 = scmp.eq.s32.totalorder %s9, 0
    %p29 = por %p27, %p28
    %p30 = scmp.ne.s32.totalorder %s19, %s22
    %p31 = scmp.eq.s32.totalorder %s14, 1
    %p32 = por %p30, %p31
    %p33 = scmp.ne.s32.totalorder %s22, %s23
    %p34 = scmp.eq.s32.totalorder %s14, 0
    %p35 = por %p33, %p34
    %p36 = scmp.ne.s32.totalorder %s22, %s23
    %p37 = scmp.eq.s32.totalorder %s15, 1
    %p38 = por %p36, %p37
    %p40 = scmp.ne.s32.totalorder %s23, %s39
    %p41 = scmp.eq.s32.totalorder %s15, 0
    %p42 = por %p40, %p41
    %s44 = sadd.s32 %s43, 1
    %p47 = scmp.eq.s32.totalorder %s9, 1
    %p48 = scmp.ne.s32.totalorder %s43, %s45
    %p49 = scmp.eq.s32.totalorder %s9, 0
    %p50 = por %p48, %p49
    %p51 = scmp.ne.s32.totalorder %s43, %s45
    %p52 = scmp.eq.s32.totalorder %s14, 1
    %p53 = por %p51, %p52
    %p54 = scmp.ne.s32.totalorder %s45, %s46
    %p55 = scmp.eq.s32.totalorder %s14, 0
    %p56 = por %p54, %p55
    %p57 = scmp.ne.s32.totalorder %s45, %s46
    %p58 = scmp.eq.s32.totalorder %s15, 1
    %p59 = por %p57, %p58
    %p61 = scmp.ne.s32.totalorder %s46, %s60
    %p62 = scmp.eq.s32.totalorder %s15, 0
    %p63 = por %p61, %p62
    %s65 = sadd.s32 %s64, 1
    %p68 = scmp.eq.s32.totalorder %s9, 1
    %p69 = scmp.ne.s32.totalorder %s64, %s66
    %p70 = scmp.eq.s32.totalorder %s9, 0
    %p71 = por %p69, %p70
    %p72 = scmp.ne.s32.totalorder %s64, %s66
    %p73 = scmp.eq.s32.totalorder %s14, 1
    %p74 = por %p72, %p73
    %p75 = scmp.ne.s32.totalorder %s66, %s67
    %p76 = scmp.eq.s32.totalorder %s14, 0
    %p77 = por %p75, %p76
    %p78 = scmp.ne.s32.totalorder %s66, %s67
    %p79 = scmp.eq.s32.totalorder %s15, 1
    %p80 = por %p78, %p79
    %p82 = scmp.ne.s32.totalorder %s67, %s81
    %p83 = scmp.eq.s32.totalorder %s15, 0
    %p84 = por %p82, %p83
    %s85 = ssub.s32 %s9, %s16
    %p86 = scmp.eq.s32.totalorder %s85, 0
    %s88 = sadd.s32 %s87, 1
    %s89 = scalar_select %p86, %s87, %s88
    %p92 = pneg %p86
    %p93 = scmp.eq.s32.totalorder %s9, 1
    %p94 = por %p92, %p93
    %p95 = scmp.ne.s32.totalorder %s87, %s90
    %p96 = scmp.eq.s32.totalorder %s9, 0
    %p97 = por %p95, %p96
    %p98 = scmp.ne.s32.totalorder %s87, %s90
    %p99 = scmp.eq.s32.totalorder %s14, 1
    %p100 = por %p98, %p99
    %p101 = scmp.ne.s32.totalorder %s90, %s91
    %p102 = scmp.eq.s32.totalorder %s14, 0
    %p103 = por %p101, %p102
    %p104 = scmp.ne.s32.totalorder %s90, %s91
    %p105 = scmp.eq.s32.totalorder %s15, 1
    %p106 = por %p104, %p105
    %p108 = scmp.ne.s32.totalorder %s91, %s107
    %p109 = scmp.eq.s32.totalorder %s15, 0
    %p110 = por %p108, %p109
    %p111 = scmp.le.s32.totalorder 1, %s9
    %p112 = scmp.lt.s32.totalorder %s9, 3
    %p113 = pnand %p111, %p112
    %p114 = pneg %p113
    // Predicated region
    $region9: #{adda_predictor_forward.1} parent=5 // pred_check
      _
    $region10: #{adda_predictor_forward.1} parent=5 // pred_check_branch
      %116 = sbr.rel (%p113) target = $region12
    $region11: #{adda_predictor_forward.1} parent=5 // pred_region
      %s117 = ssub.s32 %s9, 1
      // Predicated region
      $region13: #{adda_predictor_forward.1} parent=11 // pred_check
        %p118 = pneg %p56
      $region14: #{adda_predictor_forward.1} parent=11 // pred_check_branch
        %120 = sbr.rel (%p118) target = $region16
      $region15: #{adda_predictor_forward.1} parent=11 // pred_region
        _
      $region16: #{adda_predictor_forward.1} parent=11 // pred_fallthru
        _
      // Predicated region
      $region17: #{adda_predictor_forward.1} parent=11 // pred_check
        %p121 = pneg %p77
      $region18: #{adda_predictor_forward.1} parent=11 // pred_check_branch
        %123 = sbr.rel (%p121) target = $region20
      $region19: #{adda_predictor_forward.1} parent=11 // pred_region
        _
      $region20: #{adda_predictor_forward.1} parent=11 // pred_fallthru
        _
    $region12: #{adda_predictor_forward.1} parent=5 // pred_fallthru
      _
    %p124 = scmp.lt.s32.totalorder %s9, 2
    // Predicated region
    $region21: #{adda_predictor_forward.1} parent=5 // pred_check
      %p125 = pneg %p124
    $region22: #{adda_predictor_forward.1} parent=5 // pred_check_branch
      %127 = sbr.rel (%p125) target = $region24
    $region23: #{adda_predictor_forward.1} parent=5 // pred_region
      // Predicated region
      $region25: #{adda_predictor_forward.1} parent=23 // pred_check
        %p128 = pneg %p29
      $region26: #{adda_predictor_forward.1} parent=23 // pred_check_branch
        %130 = sbr.rel (%p128) target = $region28
      $region27: #{adda_predictor_forward.1} parent=23 // pred_region
        %s131 = smul.u32 4, %s9
        %p132 = scmp.lt.s32.totalorder %s131, 7
        %s133 = scalar_select %p132, %s131, 7
        %s134 = smul.addr %s133, 8
        %s135 = scalar_lea.vmem %s0, %s134
        %s136 = smul.u32 4, %s9
      $region28: #{adda_predictor_forward.1} parent=23 // pred_fallthru
        _
    $region24: #{adda_predictor_forward.1} parent=5 // pred_fallthru
      _
    %p137 = scmp.le.s32.totalorder 1, %s9
    %p138 = scmp.lt.s32.totalorder %s9, 3
    %p139 = pnand %p137, %p138
    %p140 = pneg %p139
    // Predicated region
    $region29: #{adda_predictor_forward.1} parent=5 // pred_check
      _
    $region30: #{adda_predictor_forward.1} parent=5 // pred_check_branch
      %142 = sbr.rel (%p139) target = $region32
    $region31: #{adda_predictor_forward.1} parent=5 // pred_region
      %s143 = ssub.s32 %s9, 1
      %s144 = smul.u32 4, %s14
      %p145 = scmp.lt.s32.totalorder %s144, 7
      %s146 = scalar_select %p145, %s144, 7
      %s147 = smul.addr %s146, 8
      %s148 = scalar_lea.vmem %s0, %s147
      %p149 = pneg %p35
      %p150 = pneg %p32
      %p151 = pneg %p56
      %p152 = pneg %p53
      %p153 = pneg %p77
      %p154 = pneg %p74
      %p155 = pneg %p103
      %p156 = pneg %p100
      %s157 = smul.u32 4, %s14
      %p158 = scmp.lt.s32.totalorder %s157, 7
      %s159 = scalar_select %p158, %s157, 7
      %s160 = smul.addr %s159, 8
      %s161 = scalar_lea.vmem %s3, %s160
      %s162 = smul.u32 4, %s14
      %p163 = scmp.lt.s32.totalorder %s162, 7
      %s164 = scalar_select %p163, %s162, 7
      %s165 = smul.addr %s164, 8
      %s166 = scalar_lea.vmem %s0, %s165
      %s167 = smul.u32 4, %s14
      %s168 = smul.u32 4, %s14
      %p169 = scmp.lt.s32.totalorder %s168, 7
      %s170 = scalar_select %p169, %s168, 7
      %s171 = smul.addr %s170, 8
      %s172 = scalar_lea.vmem %s3, %s171
      %s173 = smul.u32 4, %s14
      %v174 = vld [vmem:[%s166] sm:$0xff]
      %v175 = vld [vmem:[%s166 + $0x8] sm:$0xff]
      %v176 = vld [vmem:[%s166 + $0x10] sm:$0xff]
      %v177 = vld [vmem:[%s166 + $0x18] sm:$0xff]
      %v178 = vld [vmem:[%s1] sm:$0xff]
      %v179 = vld [vmem:[%s1 + $0x8] sm:$0xff]
      %v180 = vld [vmem:[%s1 + $0x10] sm:$0xff]
      %v181 = vld [vmem:[%s1 + $0x18] sm:$0xff]
      %v182 = vld [vmem:[%s1 + $0x20] sm:$0xff]
      %v183 = vld [vmem:[%s1 + $0x28] sm:$0xff]
      %v184 = vld [vmem:[%s1 + $0x30] sm:$0xff]
      %v185 = vld [vmem:[%s1 + $0x38] sm:$0xff]
      %v186 = vld [vmem:[%s2] sm:$0x1]
      %v188 = vlaneseq
      %v189 = vshrl.u32 %v188, 7
      %v190 = vsub.s32 0, %v189
      %v191 = vrot.slane %v186, %v190
      %vm193 = vcmask 523264
      %v195 = vsel %vm193, %v174, 0
      %v198 = vsel %vm193, %v175, 0
      %v201 = vsel %vm193, %v176, 0
      %v204 = vsel %vm193, %v177, 0
      %206 = vmatprep.subr.mxu0 0.0
      %207 = vmatpush1.msra.mxu0 %v178
      %208 = vmatprep.subr.mxu0 0.0
      %209 = vmatpush1.msra.mxu0 %v179
      %210 = vmatprep.subr.mxu0 0.0
      %211 = vmatpush1.msra.mxu0 %v180
      %212 = vmatprep.subr.mxu0 0.0
      %213 = vmatpush1.msra.mxu0 %v181
      %214 = vmatprep.subr.mxu0 0.0
      %215 = vmatpush1.msra.mxu0 %v182
      %216 = vmatprep.subr.mxu0 0.0
      %217 = vmatpush1.msra.mxu0 %v183
      %218 = vmatprep.subr.mxu0 0.0
      %219 = vmatpush1.msra.mxu0 %v184
      %220 = vmatprep.subr.mxu0 0.0
      %221 = vmatpush1.msra.mxu0 %v185
      %222 = vmatprep.subr.mxu0 0.0
      %223 = vmatpush1.msra.mxu0 0.0
      %224 = vmatprep.subr.mxu0 0.0
      %225 = vmatpush1.msra.mxu0 0.0
      %226 = vmatprep.subr.mxu0 0.0
      %227 = vmatpush1.msra.mxu0 0.0
      %228 = vmatprep.subr.mxu0 0.0
      %229 = vmatpush1.msra.mxu0 0.0
      %230 = vmatprep.subr.mxu0 0.0
      %231 = vmatpush1.msra.mxu0 0.0
      %232 = vmatprep.subr.mxu0 0.0
      %233 = vmatpush1.msra.mxu0 0.0
      %234 = vmatprep.subr.mxu0 0.0
      %235 = vmatpush1.msra.mxu0 0.0
      %236 = vmatprep.subr.mxu0 0.0
      %237 = vmatpush1.msra.mxu0 0.0
      %238 = vmatprep.subr.mxu0 0.0
      %239 = vmatpush1.msra.mxu0 0.0
      %240 = vmatprep.subr.mxu0 0.0
      %241 = vmatpush1.msra.mxu0 0.0
      %242 = vmatprep.subr.mxu0 0.0
      %243 = vmatpush1.msra.mxu0 0.0
      %244 = vmatprep.subr.mxu0 0.0
      %245 = vmatpush1.msra.mxu0 0.0
      %246 = vmatprep.subr.mxu0 0.0
      %247 = vmatpush1.msra.mxu0 0.0
      %248 = vmatprep.subr.mxu0 0.0
      %249 = vmatpush1.msra.mxu0 0.0
      %250 = vmatprep.subr.mxu0 0.0
      %251 = vmatpush1.msra.mxu0 0.0
      %252 = vmatprep.subr.mxu0 0.0
      %253 = vmatpush1.msra.mxu0 0.0
      %254 = vmatprep.subr.mxu0 0.0
      %255 = vmatpush1.msra.mxu0 0.0
      %256 = vmatprep.subr.mxu0 0.0
      %257 = vmatpush1.msra.mxu0 0.0
      %258 = vmatprep.subr.mxu0 0.0
      %259 = vmatpush1.msra.mxu0 0.0
      %260 = vmatprep.subr.mxu0 0.0
      %261 = vmatpush1.msra.mxu0 0.0
      %262 = vmatprep.subr.mxu0 0.0
      %263 = vmatpush1.msra.mxu0 0.0
      %264 = vmatprep.subr.mxu0 0.0
      %265 = vmatpush1.msra.mxu0 0.0
      %266 = vmatprep.subr.mxu0 0.0
      %267 = vmatpush1.msra.mxu0 0.0
      %268 = vmatprep.subr.mxu0 0.0
      %269 = vmatpush1.msra.mxu0 0.0
      %270 = vmatprep.mubr.f32.mxu0 0.0
      %271 = vmatmul.mubr.f32.gmra.mrb[0].mxu0 %v195
      %v272 = vpop.f32.mrb[0].mxu0
      %v273 = vadd.f32 %v191, %v272
      %v274 = vpop.f32.mrb[0].mxu0
      %275 = vmatprep.mubr.f32.mxu0 0.0
      %276 = vmatmul.mubr.f32.gmra.mrb[0].mxu0 %v198
      %v277 = vpop.f32.mrb[0].mxu0
      %v278 = vadd.f32 %v191, %v277
      %v279 = vpop.f32.mrb[0].mxu0
      %280 = vmatprep.mubr.f32.mxu0 0.0
      %281 = vmatmul.mubr.f32.gmra.mrb[0].mxu0 %v201
      %v282 = vpop.f32.mrb[0].mxu0
      %v283 = vadd.f32 %v191, %v282
      %v284 = vpop.f32.mrb[0].mxu0
      %285 = vmatprep.mubr.f32.mxu0 0.0
      %286 = vmatmul.mubr.f32.gmra.mrb[0].mxu0 %v204
      %v287 = vpop.f32.mrb[0].mxu0
      %v288 = vadd.f32 %v191, %v287
      %v289 = vpop.f32.mrb[0].mxu0
      %290 = vdwg.mxu0
      %291 = vmax.xlane.f32.xlu0 %v273
      %v292 = vpop.xlane.xlu0 %291
      %293 = vmax.xlane.f32.xlu0 %v278
      %v294 = vpop.xlane.xlu0 %293
      %295 = vmax.xlane.f32.xlu0 %v283
      %v296 = vpop.xlane.xlu0 %295
      %297 = vmax.xlane.f32.xlu0 %v288
      %v298 = vpop.xlane.xlu0 %297
      %v299 = vsub.f32 %v273, %v292
      %v300 = vsub.f32 %v278, %v294
      %v301 = vsub.f32 %v283, %v296
      %v302 = vsub.f32 %v288, %v298
      %v303 = vmul.f32 %v299, 1.442695
      %v304 = vpow.pop %v303
      %v305 = vmul.f32 %v300, 1.442695
      %v306 = vpow.pop %v305
      %v307 = vmul.f32 %v301, 1.442695
      %v308 = vpow.pop %v307
      %v309 = vmul.f32 %v302, 1.442695
      %v310 = vpow.pop %v309
      %311 = vadd.xlane.f32.xlu0 %v304
      %v312 = vpop.xlane.xlu0 %311
      %313 = vadd.xlane.f32.xlu0 %v306
      %v314 = vpop.xlane.xlu0 %313
      %315 = vadd.xlane.f32.xlu0 %v308
      %v316 = vpop.xlane.xlu0 %315
      %317 = vadd.xlane.f32.xlu0 %v310
      %v318 = vpop.xlane.xlu0 %317
      %v319 = vlog2.pop %v312
      %v320 = vmul.f32 %v319, 0.6931472
      %v321 = vlog2.pop %v314
      %v322 = vmul.f32 %v321, 0.6931472
      %v323 = vlog2.pop %v316
      %v324 = vmul.f32 %v323, 0.6931472
      %v325 = vlog2.pop %v318
      %v326 = vmul.f32 %v325, 0.6931472
      %v327 = vsub.f32 %v299, %v320
      %v328 = vsub.f32 %v300, %v322
      %v329 = vsub.f32 %v301, %v324
      %v330 = vsub.f32 %v302, %v326
      %331 = vst [vmem:[%s172] sm:$0xff] %v327
      %332 = vst [vmem:[%s172 + $0x8] sm:$0xff] %v328
      %333 = vst [vmem:[%s172 + $0x10] sm:$0xff] %v329
      %334 = vst [vmem:[%s172 + $0x18] sm:$0xff] %v330
      %s335 = smul.u32 4, %s14
      %p336 = scmp.lt.s32.totalorder %s335, 7
      %s337 = scalar_select %p336, %s335, 7
      %s338 = smul.addr %s337, 8
      %s339 = scalar_lea.vmem %s3, %s338
      // Predicated region
      $region33: #{adda_predictor_forward.1} parent=31 // pred_check
        %p340 = pneg %p100
      $region34: #{adda_predictor_forward.1} parent=31 // pred_check_branch
        %342 = sbr.rel (%p340) target = $region36
      $region35: #{adda_predictor_forward.1} parent=31 // pred_region
        %s343 = smul.u32 4, %s14
      $region36: #{adda_predictor_forward.1} parent=31 // pred_fallthru
        _
    $region32: #{adda_predictor_forward.1} parent=5 // pred_fallthru
      _
    %p344 = scmp.le.s32.totalorder 2, %s9
    // Predicated region
    $region37: #{adda_predictor_forward.1} parent=5 // pred_check
      %p345 = pneg %p344
    $region38: #{adda_predictor_forward.1} parent=5 // pred_check_branch
      %347 = sbr.rel (%p345) target = $region40
    $region39: #{adda_predictor_forward.1} parent=5 // pred_region
      %s348 = ssub.s32 %s9, 2
      // Predicated region
      $region41: #{adda_predictor_forward.1} parent=39 // pred_check
        %p349 = pneg %p106
      $region42: #{adda_predictor_forward.1} parent=39 // pred_check_branch
        %351 = sbr.rel (%p349) target = $region44
      $region43: #{adda_predictor_forward.1} parent=39 // pred_region
        %s352 = smul.u32 4, %s15
        %p353 = scmp.lt.s32.totalorder %s352, 7
        %s354 = scalar_select %p353, %s352, 7
        %s355 = smul.addr %s354, 8
        %s356 = scalar_lea.vmem %s3, %s355
      $region44: #{adda_predictor_forward.1} parent=39 // pred_fallthru
        _
    $region40: #{adda_predictor_forward.1} parent=5 // pred_fallthru
      _
  $region6: #{adda_predictor_forward.1} parent=0 // loop_footer
    %s13 = sadd.s32 1, %s9
  $region7: #{adda_predictor_forward.1} parent=0 // loop_footer_branch
    %8 = sbr.rel target = $region3
  $region8: #{adda_predictor_forward.1} parent=0 // loop_exit
    _

</llo_original>
